<compile_context>
chip_gen: v6e
topology: v6e:2x2x1
jax: 0.10.0
libtpu: 0.0.40
codegen_flags: <defaults>
</compile_context>

<pallas_src>
import jax
import jax.numpy as jnp
from jax.experimental import pallas as pl
from jax.experimental.pallas import tpu as pltpu

_LANE = 128
_SUBLANE = 8


def _round_up(x, m):
    return ((x + m - 1) // m) * m


def _cdiv(a, b):
    return (a + b - 1) // b


def _vmem_budgets():
    """Generation-aware VMEM numbers (v7x: 64 MiB physical, v5e/v6e: 128 MiB)."""
    try:
        cap = int(pltpu.get_tpu_info().vmem_capacity_bytes)
    except Exception:
        cap = 64 * 1024 * 1024                      # conservative (v7x-sized) fallback
    limit = min(cap - 24 * 1024 * 1024, (3 * cap) // 4)   # scoped limit w/ headroom
    limit = max(limit, 32 * 1024 * 1024)
    tile_budget = max(limit - 16 * 1024 * 1024, limit // 2)
    return tile_budget, limit


# ----------------------------------------------------------------------------
# One-time parameter prep (hoisted out of the per-call hot path).
# ----------------------------------------------------------------------------
def prepare_linear_params(weight, bias):
    """weight: (latent_dim, input_feats) torch nn.Linear convention; bias: (latent_dim,).

    Returns W^T zero-padded to a lane-dense Np (bf16) and bias padded ((1, Np), f32).
    """
    latent_dim, input_feats = weight.shape
    n_pad = _round_up(latent_dim, _LANE)
    # NOTE: K (input_feats) is left un-padded — it is always the full dim of its
    # axis so the (8,128) rule is satisfied; padding it to 128 is an optional
    # micro-win only if the producer already emits it padded.
    w_t = jnp.zeros((input_feats, n_pad), dtype=jnp.bfloat16)
    w_t = w_t.at[:, :latent_dim].set(weight.T.astype(jnp.bfloat16))
    b = jnp.zeros((1, n_pad), dtype=jnp.float32)
    b = b.at[:, :latent_dim].set(bias.astype(jnp.float32))
    return w_t, b


# ----------------------------------------------------------------------------
# Fused (permute folded) kernel.
# ----------------------------------------------------------------------------
def _input_process_kernel(x_ref, w_ref, b_ref, o_ref):
    """Fused permute + poseEmbedding Linear.

    x_ref: (TB, K, TF)   f32        block of x in native (bs, feats, frames) layout
    w_ref: (K, Np)       bf16       W^T, lane-dense padded (resident)
    b_ref: (1, Np)       f32        bias (resident)
    o_ref: (TF, TB, Np)  f32/bf16   block of the (frames, batch, latent) output
    """
    w = w_ref[...]
    tf, tb, n_pad = o_ref.shape
    # Hoist the bias broadcast out of the unrolled batch loop.
    bias = jnp.broadcast_to(b_ref[...], (tf, n_pad))
    for b in range(tb):  # static unroll over the (small) batch tile
        # (K, TF) -> (TF, K) puts frames on the MXU rows; the f32->bf16 cast is
        # done here so x is only ever read from HBM once, as f32.
        xb_t = jnp.transpose(x_ref[b]).astype(jnp.bfloat16)
        acc = jnp.dot(xb_t, w, preferred_element_type=jnp.float32)     # (TF, Np) f32
        o_ref[:, b, :] = (acc + bias).astype(o_ref.dtype)


def _pick_tiles(bs, nframes, k, n_pad, tile_budget):
    # Batch tile: sublane dim of the output block -> multiple of 8 (ragged last
    # tile is write-masked) or the full bs.
    tb = bs if bs <= _SUBLANE else _SUBLANE

    # Frame tile: lane dim of the x block -> multiple of 128, or the full
    # nframes when nframes < 128 (the "equal full dim" escape of the rule).
    if nframes < _LANE:
        tf = nframes
    else:
        def footprint(tf_):
            streamed = 2 * (tb * k * tf_ * 4 + tf_ * tb * n_pad * 4)   # x + out, double buffered
            resident = 2 * (k * n_pad * 2 + n_pad * 4)                 # W^T + bias, double buffered
            return streamed + resident

        tf = _LANE
        for cand in (2048, 1536, 1024, 768, 512, 384, 256, 128):
            if cand <= _round_up(nframes, _LANE) and footprint(cand) <= tile_budget:
                tf = cand
                break
        # Keep >= 2 frame tiles when possible so v7x's 2nd TensorCore has work.
        if nframes >= 2 * _LANE:
            tf = min(tf, max(_LANE, (nframes // 2) // _LANE * _LANE))
    return tb, tf


def _fused_forward(x, w_t_pad, bias_pad, latent_dim, out_dtype):
    bs, body_feat_dim, nfeats, nframes = x.shape
    input_feats = body_feat_dim * nfeats
    k, n_pad = w_t_pad.shape
    assert k == input_feats

    # Free reshape (merges two contiguous axes; no data movement, no permute).
    x3 = x.reshape(bs, input_feats, nframes)

    tile_budget, vmem_limit = _vmem_budgets()
    tb, tf = _pick_tiles(bs, nframes, input_feats, n_pad, tile_budget)
    grid = (_cdiv(nframes, tf), _cdiv(bs, tb))          # ragged last blocks OK

    out = pl.pallas_call(
        _input_process_kernel,
        out_shape=jax.ShapeDtypeStruct((nframes, bs, n_pad), out_dtype),
        grid_spec=pltpu.PrefetchScalarGridSpec(
            num_scalar_prefetch=0,
            grid=grid,
            in_specs=[
                # streamed x blocks in native layout
                pl.BlockSpec((tb, input_feats, tf), lambda ft, bt: (bt, 0, ft)),
                # VMEM-resident W^T / bias (constant index map -> no re-fetch)
                pl.BlockSpec((input_feats, n_pad), lambda ft, bt: (0, 0)),
                pl.BlockSpec((1, n_pad), lambda ft, bt: (0, 0)),
            ],
            out_specs=pl.BlockSpec((tf, tb, n_pad), lambda ft, bt: (ft, bt, 0)),
        ),
        compiler_params=pltpu.CompilerParams(
            dimension_semantics=("parallel", "parallel"),   # both axes data-parallel
            vmem_limit_bytes=int(vmem_limit),
        ),
    )(x3, w_t_pad, bias_pad)

    if n_pad != latent_dim:
        out = out[..., :latent_dim]
    return out


# ----------------------------------------------------------------------------
# Fallback path: wrapper-side permute + plain tiled Linear kernel.
# Only used if the fused layout fails to lower on this toolchain.
# ----------------------------------------------------------------------------
def _flat_linear_kernel(x_ref, w_ref, b_ref, o_ref):
    acc = jnp.dot(x_ref[...].astype(jnp.bfloat16), w_ref[...],
                  preferred_element_type=jnp.float32)
    o_ref[...] = (acc + b_ref[...]).astype(o_ref.dtype)


def _fallback_forward(x, w_t_pad, bias_pad, latent_dim, out_dtype):
    bs, body_feat_dim, nfeats, nframes = x.shape
    k, n_pad = w_t_pad.shape
    m = nframes * bs
    x2 = jnp.transpose(x, (3, 0, 1, 2)).reshape(m, k)   # costs one extra HBM pass
    tm = m if m <= 512 else 512
    _, vmem_limit = _vmem_budgets()
    out = pl.pallas_call(
        _flat_linear_kernel,
        out_shape=jax.ShapeDtypeStruct((m, n_pad), out_dtype),
        grid_spec=pltpu.PrefetchScalarGridSpec(
            num_scalar_prefetch=0,
            grid=(_cdiv(m, tm),),
            in_specs=[pl.BlockSpec((tm, k), lambda i: (i, 0)),
                      pl.BlockSpec((k, n_pad), lambda i: (0, 0)),
                      pl.BlockSpec((1, n_pad), lambda i: (0, 0))],
            out_specs=pl.BlockSpec((tm, n_pad), lambda i: (i, 0)),
        ),
        compiler_params=pltpu.CompilerParams(
            dimension_semantics=("parallel",), vmem_limit_bytes=int(vmem_limit)),
    )(x2, w_t_pad, bias_pad)
    if n_pad != latent_dim:
        out = out[:, :latent_dim]
    return out.reshape(nframes, bs, latent_dim)


# ----------------------------------------------------------------------------
# Public forward.
# ----------------------------------------------------------------------------
def input_process_forward(x, w_t_pad, bias_pad, latent_dim, *, out_dtype=jnp.float32):
    """InputProcess.forward: (bs, body_feat_dim, nfeats, nframes) -> (nframes, bs, latent_dim).

    Set out_dtype=jnp.bfloat16 if the downstream transformer runs in bf16 (halves
    the dominant output HBM stream); default f32 preserves the module semantics.
    """
    try:
        return _fused_forward(x, w_t_pad, bias_pad, latent_dim, out_dtype)
    except Exception:
        # Safety net only: some toolchains may reject the fused block layout.
        return _fallback_forward(x, w_t_pad, bias_pad, latent_dim, out_dtype)


def input_process_forward_from_params(x, weight, bias):
    """Convenience wrapper taking torch-convention params directly."""
    w_t_pad, bias_pad = prepare_linear_params(weight, bias)
    return input_process_forward(x, w_t_pad, bias_pad, weight.shape[0])


if __name__ == "__main__":
    # Small shapes consistent with the module (production shapes would have
    # larger bs / nframes and latent_dim >= 128).
    bs, body_feat_dim, nfeats, nframes = 2, 4, 4, 8
    input_feats = body_feat_dim * nfeats      # 16
    latent_dim = 32

    key = jax.random.PRNGKey(0)
    kx, kw, kb = jax.random.split(key, 3)
    x = jax.random.normal(kx, (bs, body_feat_dim, nfeats, nframes), dtype=jnp.float32)
    weight = jax.random.normal(kw, (latent_dim, input_feats), dtype=jnp.float32) * 0.02
    bias = jax.random.normal(kb, (latent_dim,), dtype=jnp.float32) * 0.02

    # One-time parameter prep (hoisted out of the per-call path).
    w_t_pad, bias_pad = prepare_linear_params(weight, bias)

    out = input_process_forward(x, w_t_pad, bias_pad, latent_dim)
    out = jax.block_until_ready(out)
    assert out.shape == (nframes, bs, latent_dim), out.shape

    # Reference check against f32 torch-Linear math. The kernel uses bf16 MXU
    # operands with f32 accumulation, so use a bf16-appropriate tolerance.
    x_ref = jnp.transpose(x, (3, 0, 1, 2)).reshape(nframes, bs, input_feats)
    ref = x_ref @ weight.T + bias
    assert jnp.allclose(out, ref, atol=2e-2, rtol=2e-2), float(jnp.max(jnp.abs(out - ref)))

    print("KERNEL_OK")
</pallas_src>

<mosaic_0001>
module attributes {stable_mosaic.version = 11 : i64} {
  func.func @_input_process_kernel(%arg0: i32, %arg1: i32, %arg2: memref<2x16x8xf32, #tpu.memory_space<vmem>>, %arg3: memref<16x128xbf16, #tpu.memory_space<vmem>>, %arg4: memref<1x128xf32, #tpu.memory_space<vmem>>, %arg5: memref<8x2x128xf32, #tpu.memory_space<vmem>>) attributes {dimension_semantics = [#tpu.dimension_semantics<parallel>, #tpu.dimension_semantics<parallel>], iteration_bounds = array<i64: 1, 1>, scalar_prefetch = 0 : i64, scratch_operands = 0 : i64, tpu.core_type = #tpu.core_type<tc>, window_params = [{transform_indices = @transform_0, window_bounds = array<i64: 2, 16, 8>}, {pipeline_mode = #tpu.pipeline_mode<synchronous>, transform_indices = @transform_1, window_bounds = array<i64: 16, 128>}, {pipeline_mode = #tpu.pipeline_mode<synchronous>, transform_indices = @transform_2, window_bounds = array<i64: 1, 128>}, {transform_indices = @transform_3, window_bounds = array<i64: 8, 2, 128>}]} {
    %c0 = arith.constant 0 : index
    %c0_0 = arith.constant 0 : index
    %0 = vector.load %arg3[%c0, %c0_0] : memref<16x128xbf16, #tpu.memory_space<vmem>>, vector<16x128xbf16>
    %c0_1 = arith.constant 0 : index
    %c0_2 = arith.constant 0 : index
    %1 = vector.load %arg4[%c0_1, %c0_2] : memref<1x128xf32, #tpu.memory_space<vmem>>, vector<1x128xf32>
    %2 = vector.shape_cast %1 : vector<1x128xf32> to vector<1x128xf32>
    %3 = vector.broadcast %2 : vector<1x128xf32> to vector<8x128xf32>
    %c0_3 = arith.constant 0 : index
    %c0_4 = arith.constant 0 : index
    %c0_5 = arith.constant 0 : index
    %4 = vector.load %arg2[%c0_3, %c0_4, %c0_5] : memref<2x16x8xf32, #tpu.memory_space<vmem>>, vector<1x16x8xf32>
    %5 = vector.shape_cast %4 : vector<1x16x8xf32> to vector<16x8xf32>
    %6 = tpu.transpose %5, [1, 0] : vector<16x8xf32> -> vector<8x16xf32>
    %7 = arith.truncf %6 : vector<8x16xf32> to vector<8x16xbf16>
    %cst = arith.constant dense<0.000000e+00> : vector<8x128xf32>
    %8 = tpu.matmul %7, %0, %cst {dimension_numbers = #tpu.dot_dimension_numbers<[1], [0], [0], [1], [0, 0, 1, 1], [], []>} : vector<8x16xbf16>, vector<16x128xbf16>, vector<8x128xf32> -> vector<8x128xf32>
    %9 = arith.addf %8, %3 : vector<8x128xf32>
    %c0_6 = arith.constant 0 : index
    %c0_7 = arith.constant 0 : index
    %c0_8 = arith.constant 0 : index
    %10 = vector.load %arg5[%c0_6, %c0_7, %c0_8] : memref<8x2x128xf32, #tpu.memory_space<vmem>>, vector<8x1x128xf32>
    %11 = vector.shape_cast %10 : vector<8x1x128xf32> to vector<8x128xf32>
    %12 = vector.shape_cast %9 : vector<8x128xf32> to vector<8x1x128xf32>
    tpu.vector_store %arg5[%c0_6, %c0_7, %c0_8], %12 {strides = array<i32>} : memref<8x2x128xf32, #tpu.memory_space<vmem>>, vector<8x1x128xf32>,
    %c1 = arith.constant 1 : index
    %c0_9 = arith.constant 0 : index
    %c0_10 = arith.constant 0 : index
    %13 = vector.load %arg2[%c1, %c0_9, %c0_10] : memref<2x16x8xf32, #tpu.memory_space<vmem>>, vector<1x16x8xf32>
    %14 = vector.shape_cast %13 : vector<1x16x8xf32> to vector<16x8xf32>
    %15 = tpu.transpose %14, [1, 0] : vector<16x8xf32> -> vector<8x16xf32>
    %16 = arith.truncf %15 : vector<8x16xf32> to vector<8x16xbf16>
    %cst_11 = arith.constant dense<0.000000e+00> : vector<8x128xf32>
    %17 = tpu.matmul %16, %0, %cst_11 {dimension_numbers = #tpu.dot_dimension_numbers<[1], [0], [0], [1], [0, 0, 1, 1], [], []>} : vector<8x16xbf16>, vector<16x128xbf16>, vector<8x128xf32> -> vector<8x128xf32>
    %18 = arith.addf %17, %3 : vector<8x128xf32>
    %c0_12 = arith.constant 0 : index
    %c1_13 = arith.constant 1 : index
    %c0_14 = arith.constant 0 : index
    %19 = vector.load %arg5[%c0_12, %c1_13, %c0_14] : memref<8x2x128xf32, #tpu.memory_space<vmem>>, vector<8x1x128xf32>
    %20 = vector.shape_cast %19 : vector<8x1x128xf32> to vector<8x128xf32>
    %21 = vector.shape_cast %18 : vector<8x128xf32> to vector<8x1x128xf32>
    tpu.vector_store %arg5[%c0_12, %c1_13, %c0_14], %21 {strides = array<i32>} : memref<8x2x128xf32, #tpu.memory_space<vmem>>, vector<8x1x128xf32>,
    return
  }
  func.func @transform_0(%arg0: i32, %arg1: i32) -> (i32, i32, i32) {
    %c0_i32 = arith.constant 0 : i32
    %c0_i32_0 = arith.constant 0 : i32
    return %arg1, %c0_i32, %arg0 : i32, i32, i32
  }
  func.func @transform_1(%arg0: i32, %arg1: i32) -> (i32, i32) {
    %c0_i32 = arith.constant 0 : i32
    %c0_i32_0 = arith.constant 0 : i32
    %c0_i32_1 = arith.constant 0 : i32
    return %c0_i32, %c0_i32_0 : i32, i32
  }
  func.func @transform_2(%arg0: i32, %arg1: i32) -> (i32, i32) {
    %c0_i32 = arith.constant 0 : i32
    %c0_i32_0 = arith.constant 0 : i32
    %c0_i32_1 = arith.constant 0 : i32
    return %c0_i32, %c0_i32_0 : i32, i32
  }
  func.func @transform_3(%arg0: i32, %arg1: i32) -> (i32, i32, i32) {
    %c0_i32 = arith.constant 0 : i32
    %c0_i32_0 = arith.constant 0 : i32
    return %arg0, %arg1, %c0_i32 : i32, i32, i32
  }
}

module attributes {stable_mosaic.version = 11 : i64} {
  func.func @_flat_linear_kernel(%arg0: i32, %arg1: memref<16x16xf32, #tpu.memory_space<vmem>>, %arg2: memref<16x128xbf16, #tpu.memory_space<vmem>>, %arg3: memref<1x128xf32, #tpu.memory_space<vmem>>, %arg4: memref<16x128xf32, #tpu.memory_space<vmem>>) attributes {dimension_semantics = [#tpu.dimension_semantics<parallel>], iteration_bounds = array<i64: 1>, scalar_prefetch = 0 : i64, scratch_operands = 0 : i64, tpu.core_type = #tpu.core_type<tc>, window_params = [{transform_indices = @transform_0, window_bounds = array<i64: 16, 16>}, {pipeline_mode = #tpu.pipeline_mode<synchronous>, transform_indices = @transform_1, window_bounds = array<i64: 16, 128>}, {pipeline_mode = #tpu.pipeline_mode<synchronous>, transform_indices = @transform_2, window_bounds = array<i64: 1, 128>}, {transform_indices = @transform_3, window_bounds = array<i64: 16, 128>}]} {
    %c0 = arith.constant 0 : index
    %c0_0 = arith.constant 0 : index
    %0 = vector.load %arg1[%c0, %c0_0] : memref<16x16xf32, #tpu.memory_space<vmem>>, vector<16x16xf32>
    %1 = arith.truncf %0 : vector<16x16xf32> to vector<16x16xbf16>
    %c0_1 = arith.constant 0 : index
    %c0_2 = arith.constant 0 : index
    %2 = vector.load %arg2[%c0_1, %c0_2] : memref<16x128xbf16, #tpu.memory_space<vmem>>, vector<16x128xbf16>
    %cst = arith.constant dense<0.000000e+00> : vector<16x128xf32>
    %3 = tpu.matmul %1, %2, %cst {dimension_numbers = #tpu.dot_dimension_numbers<[1], [0], [0], [1], [0, 0, 1, 1], [], []>} : vector<16x16xbf16>, vector<16x128xbf16>, vector<16x128xf32> -> vector<16x128xf32>
    %c0_3 = arith.constant 0 : index
    %c0_4 = arith.constant 0 : index
    %4 = vector.load %arg3[%c0_3, %c0_4] : memref<1x128xf32, #tpu.memory_space<vmem>>, vector<1x128xf32>
    %5 = vector.broadcast %4 : vector<1x128xf32> to vector<16x128xf32>
    %6 = arith.addf %3, %5 : vector<16x128xf32>
    %c0_5 = arith.constant 0 : index
    %c0_6 = arith.constant 0 : index
    %7 = vector.load %arg4[%c0_5, %c0_6] : memref<16x128xf32, #tpu.memory_space<vmem>>, vector<16x128xf32>
    tpu.vector_store %arg4[%c0_5, %c0_6], %6 {strides = array<i32>} : memref<16x128xf32, #tpu.memory_space<vmem>>, vector<16x128xf32>,
    return
  }
  func.func @transform_0(%arg0: i32) -> (i32, i32) {
    %c0_i32 = arith.constant 0 : i32
    %c0_i32_0 = arith.constant 0 : i32
    return %arg0, %c0_i32 : i32, i32
  }
  func.func @transform_1(%arg0: i32) -> (i32, i32) {
    %c0_i32 = arith.constant 0 : i32
    %c0_i32_0 = arith.constant 0 : i32
    %c0_i32_1 = arith.constant 0 : i32
    return %c0_i32, %c0_i32_0 : i32, i32
  }
  func.func @transform_2(%arg0: i32) -> (i32, i32) {
    %c0_i32 = arith.constant 0 : i32
    %c0_i32_0 = arith.constant 0 : i32
    %c0_i32_1 = arith.constant 0 : i32
    return %c0_i32, %c0_i32_0 : i32, i32
  }
  func.func @transform_3(%arg0: i32) -> (i32, i32) {
    %c0_i32 = arith.constant 0 : i32
    %c0_i32_0 = arith.constant 0 : i32
    return %arg0, %c0_i32 : i32, i32
  }
}

</mosaic_0001>

<llo_original>
// kernel: tpu_custom_call.1
$region0: #{tpu_custom_call.1}
  #allocation0 [shape = 'u32[]', space=smem, size = 0x4, offset = 0x4, fixed_abs, tag = 'smem constant byte address 0x4 - core index']
  #allocation1 [shape = 'u32[144,128]{1,0:T(1,128)}', space=vmem, size = 0x12000, scoped, tag = 'internal scratch']
  %s0 = inlined_call_operand.vmem [shape: f32[2,16,8], index: 0, kind: input, shape index: {}]
  %s1 = inlined_call_operand.vmem [shape: bf16[16,128], index: 1, kind: input, shape index: {}]
  %s2 = inlined_call_operand.vmem [shape: f32[1,128], index: 2, kind: input, shape index: {}]
  %s3 = inlined_call_operand.hbm [shape: f32[8,2,128], index: 3, kind: output, shape index: {}]
  %s4 = sld [smem:[#allocation0]]
  $region22: #{tpu_custom_call.1} parent=0
    _
  %s6 = ssub.s32 1, %s4
  %s7 = scalar_select 0, %s6, %s4
  $region1: #{tpu_custom_call.1} parent=0
    #allocation2 [shape = 'u8[8192]{0}', space=vmem, size = 0x2000, scoped, tag = 'output window, operand 0, single buffered']
    #allocation3 [shape = 's32[1]{0}', space=sflag, size = 0x4, scoped, tag = 'scoped memory for tpu_custom_call.1']
    %8 = vsyncpa [#allocation3], 0
    // Predicated region
    $region2: #{tpu_custom_call.1} parent=1 // pred_check
      _
    $region3: #{tpu_custom_call.1} parent=1 // pred_check_branch
      %10 = sbr.rel (0) target = $region5
    $region4: #{tpu_custom_call.1} parent=1 // pred_region
      _
    $region5: #{tpu_custom_call.1} parent=1 // pred_fallthru
      _
    // Predicated region
    $region6: #{tpu_custom_call.1} parent=1 // pred_check
      _
    $region7: #{tpu_custom_call.1} parent=1 // pred_check_branch
      %12 = sbr.rel (0) target = $region9
    $region8: #{tpu_custom_call.1} parent=1 // pred_region
      _
    $region9: #{tpu_custom_call.1} parent=1 // pred_fallthru
      _
    // Predicated region
    $region10: #{tpu_custom_call.1} parent=1 // pred_check
      _
    $region11: #{tpu_custom_call.1} parent=1 // pred_check_branch
      %14 = sbr.rel (0) target = $region13
    $region12: #{tpu_custom_call.1} parent=1 // pred_region
      _
    $region13: #{tpu_custom_call.1} parent=1 // pred_fallthru
      _
    %v16 = vld [vmem:[%s1] sm:$0xf]
    %v17 = vld [vmem:[%s1 + $0x4] sm:$0xf]
    %v18 = vld [vmem:[%s2] sm:$0x1]
    %v20 = vlaneseq
    %v21 = vshrl.u32 %v20, 7
    %v22 = vsub.s32 0, %v21
    %v23 = vrot.slane %v18, %v22
    %v25 = vld [vmem:[%s0] sm:$0xff]
    %v26 = vld [vmem:[%s0 + $0x8] sm:$0xff]
    %27 = vxpose.xlu0.b32.start [1/16] %v25, 128
    %28 = vxpose.xlu0.b32.cont [2/16] %v26, 128
    %29 = vxpose.xlu0.b32.cont [3/16] 0.0, 128
    %30 = vxpose.xlu0.b32.cont [4/16] 0.0, 128
    %31 = vxpose.xlu0.b32.cont [5/16] 0.0, 128
    %32 = vxpose.xlu0.b32.cont [6/16] 0.0, 128
    %33 = vxpose.xlu0.b32.cont [7/16] 0.0, 128
    %34 = vxpose.xlu0.b32.cont [8/16] 0.0, 128
    %35 = vxpose.xlu0.b32.cont [9/16] 0.0, 128
    %36 = vxpose.xlu0.b32.cont [10/16] 0.0, 128
    %37 = vxpose.xlu0.b32.cont [11/16] 0.0, 128
    %38 = vxpose.xlu0.b32.cont [12/16] 0.0, 128
    %39 = vxpose.xlu0.b32.cont [13/16] 0.0, 128
    %40 = vxpose.xlu0.b32.cont [14/16] 0.0, 128
    %41 = vxpose.xlu0.b32.cont [15/16] 0.0, 128
    %42 = vxpose.xlu0.b32.end [16/16] 0.0, 128
    %v43 = vpop.trf.xlu0
    %v44 = vpop.trf.xlu0
    %v45 = vpop.trf.xlu0
    %v46 = vpop.trf.xlu0
    %v47 = vpop.trf.xlu0
    %v48 = vpop.trf.xlu0
    %v49 = vpop.trf.xlu0
    %v50 = vpop.trf.xlu0
    %v51 = vpop.trf.xlu0
    %v52 = vpop.trf.xlu0
    %v53 = vpop.trf.xlu0
    %v54 = vpop.trf.xlu0
    %v55 = vpop.trf.xlu0
    %v56 = vpop.trf.xlu0
    %v57 = vpop.trf.xlu0
    %v58 = vpop.trf.xlu0
    %v59 = vpack.c.bf16 %v43, %v43
    %v62 = vunpack.c.l.b16 %v16
    %v63 = vunpack.c.l.b16 %v17
    %v64 = vpack.c.b16 %v63, %v62
    %vm66 = vcmask 130048
    %v68 = vsel %vm66, %v59, 0
    %70 = vmatprep.subr.bf16.mxu0 0
    %71 = vmatpush1.bf16.msra.mxu0 0
    %72 = vmatprep.subr.bf16.mxu0 0
    %73 = vmatpush1.bf16.msra.mxu0 0
    %74 = vmatprep.subr.bf16.mxu0 0
    %75 = vmatpush1.bf16.msra.mxu0 0
    %76 = vmatprep.subr.bf16.mxu0 0
    %77 = vmatpush1.bf16.msra.mxu0 0
    %78 = vmatprep.subr.bf16.mxu0 0
    %79 = vmatpush1.bf16.msra.mxu0 0
    %80 = vmatprep.subr.bf16.mxu0 0
    %81 = vmatpush1.bf16.msra.mxu0 0
    %82 = vmatprep.subr.bf16.mxu0 0
    %83 = vmatpush1.bf16.msra.mxu0 0
    %84 = vmatprep.subr.bf16.mxu0 0
    %85 = vmatpush1.bf16.msra.mxu0 %v64
    %86 = vmatprep.subr.bf16.mxu0 0
    %87 = vmatpush2.bf16.msra.mxu0 0
    %88 = vmatprep.subr.bf16.mxu0 0
    %89 = vmatpush2.bf16.msra.mxu0 0
    %90 = vmatprep.subr.bf16.mxu0 0
    %91 = vmatpush2.bf16.msra.mxu0 0
    %92 = vmatprep.subr.bf16.mxu0 0
    %93 = vmatpush2.bf16.msra.mxu0 0
    %94 = vmatprep.subr.bf16.mxu0 0
    %95 = vmatpush2.bf16.msra.mxu0 0
    %96 = vmatprep.subr.bf16.mxu0 0
    %97 = vmatpush2.bf16.msra.mxu0 0
    %98 = vmatprep.subr.bf16.mxu0 0
    %99 = vmatpush2.bf16.msra.mxu0 0
    %100 = vmatprep.subr.bf16.mxu0 0
    %101 = vmatpush2.bf16.msra.mxu0 0
    %102 = vmatprep.mubr.bf16.mxu0 0
    %103 = vmatmul.mubr.bf16.gmra.mxu0 %v68
    %v104 = vpop.f32.mrf.mxu0
    %v105 = vadd.f32 %v23, %v104
    %v106 = vpop.f32.mrf.mxu0
    %v107 = vpop.f32.mrf.mxu0
    %v108 = vpop.f32.mrf.mxu0
    %109 = vdwg.mxu0
    %v111 = vcombine.high %v105, %v105
    %v113 = vunpack.c.l.s4 1966171168
    %v114 = vunpack.c.0.s8 %v113
    %v115 = vlaneseq
    %v116 = vshrl.u32 %v115, 7
    %v117 = vsub.s32 %v114, %v116
    %v118 = vrot.slane %v105, %v117
    %v120 = vunpack.c.l.s4 1966171168
    %v121 = vunpack.c.0.s8 %v120
    %v122 = vlaneseq
    %v123 = vshrl.u32 %v122, 7
    %v124 = vsub.s32 %v121, %v123
    %v125 = vrot.slane %v111, %v124
    %v126 = vcombine.high %v118, %v118
    %v127 = vcombine.high %v125, %v125
    %v129 = vunpack.c.l.s4 1966171168
    %v130 = vunpack.c.0.s8 %v129
    %v131 = vlaneseq
    %v132 = vshrl.u32 %v131, 7
    %v133 = vsub.s32 %v130, %v132
    %v134 = vrot.slane %v118, %v133
    %v136 = vunpack.c.l.s4 1966171168
    %v137 = vunpack.c.0.s8 %v136
    %v138 = vlaneseq
    %v139 = vshrl.u32 %v138, 7
    %v140 = vsub.s32 %v137, %v139
    %v141 = vrot.slane %v125, %v140
    %v143 = vunpack.c.l.s4 1966171168
    %v144 = vunpack.c.0.s8 %v143
    %v145 = vlaneseq
    %v146 = vshrl.u32 %v145, 7
    %v147 = vsub.s32 %v144, %v146
    %v148 = vrot.slane %v126, %v147
    %v150 = vunpack.c.l.s4 1966171168
    %v151 = vunpack.c.0.s8 %v150
    %v152 = vlaneseq
    %v153 = vshrl.u32 %v152, 7
    %v154 = vsub.s32 %v151, %v153
    %v155 = vrot.slane %v127, %v154
    %v156 = vcombine.high %v134, %v134
    %v157 = vcombine.high %v141, %v141
    %v158 = vcombine.high %v148, %v148
    %v159 = vcombine.high %v155, %v155
    %168 = vst [vmem:[#allocation2] sm:$0x1] %v134
    %169 = vst [vmem:[#allocation2 + $0x2] sm:$0x1] %v148
    %170 = vst [vmem:[#allocation2 + $0x4] sm:$0x1] %v156
    %171 = vst [vmem:[#allocation2 + $0x6] sm:$0x1] %v158
    %172 = vst [vmem:[#allocation2 + $0x8] sm:$0x1] %v141
    %173 = vst [vmem:[#allocation2 + $0xa] sm:$0x1] %v155
    %174 = vst [vmem:[#allocation2 + $0xc] sm:$0x1] %v157
    %175 = vst [vmem:[#allocation2 + $0xe] sm:$0x1] %v159
    %s176 = scalar_lea.vmem %s0, 16
    %v177 = vld [vmem:[%s176] sm:$0xff]
    %v178 = vld [vmem:[%s176 + $0x8] sm:$0xff]
    %179 = vxpose.xlu0.b32.start [1/16] %v177, 128
    %180 = vxpose.xlu0.b32.cont [2/16] %v178, 128
    %181 = vxpose.xlu0.b32.cont [3/16] 0.0, 128
    %182 = vxpose.xlu0.b32.cont [4/16] 0.0, 128
    %183 = vxpose.xlu0.b32.cont [5/16] 0.0, 128
    %184 = vxpose.xlu0.b32.cont [6/16] 0.0, 128
    %185 = vxpose.xlu0.b32.cont [7/16] 0.0, 128
    %186 = vxpose.xlu0.b32.cont [8/16] 0.0, 128
    %187 = vxpose.xlu0.b32.cont [9/16] 0.0, 128
    %188 = vxpose.xlu0.b32.cont [10/16] 0.0, 128
    %189 = vxpose.xlu0.b32.cont [11/16] 0.0, 128
    %190 = vxpose.xlu0.b32.cont [12/16] 0.0, 128
    %191 = vxpose.xlu0.b32.cont [13/16] 0.0, 128
    %192 = vxpose.xlu0.b32.cont [14/16] 0.0, 128
    %193 = vxpose.xlu0.b32.cont [15/16] 0.0, 128
    %194 = vxpose.xlu0.b32.end [16/16] 0.0, 128
    %v195 = vpop.trf.xlu0
    %v196 = vpop.trf.xlu0
    %v197 = vpop.trf.xlu0
    %v198 = vpop.trf.xlu0
    %v199 = vpop.trf.xlu0
    %v200 = vpop.trf.xlu0
    %v201 = vpop.trf.xlu0
    %v202 = vpop.trf.xlu0
    %v203 = vpop.trf.xlu0
    %v204 = vpop.trf.xlu0
    %v205 = vpop.trf.xlu0
    %v206 = vpop.trf.xlu0
    %v207 = vpop.trf.xlu0
    %v208 = vpop.trf.xlu0
    %v209 = vpop.trf.xlu0
    %v210 = vpop.trf.xlu0
    %v211 = vpack.c.bf16 %v195, %v195
    %v213 = vsel %vm66, %v211, 0
    %215 = vmatprep.subr.bf16.mxu0 0
    %216 = vmatpush1.bf16.msra.mxu0 0
    %217 = vmatprep.subr.bf16.mxu0 0
    %218 = vmatpush1.bf16.msra.mxu0 0
    %219 = vmatprep.subr.bf16.mxu0 0
    %220 = vmatpush1.bf16.msra.mxu0 0
    %221 = vmatprep.subr.bf16.mxu0 0
    %222 = vmatpush1.bf16.msra.mxu0 0
    %223 = vmatprep.subr.bf16.mxu0 0
    %224 = vmatpush1.bf16.msra.mxu0 0
    %225 = vmatprep.subr.bf16.mxu0 0
    %226 = vmatpush1.bf16.msra.mxu0 0
    %227 = vmatprep.subr.bf16.mxu0 0
    %228 = vmatpush1.bf16.msra.mxu0 0
    %229 = vmatprep.subr.bf16.mxu0 0
    %230 = vmatpush1.bf16.msra.mxu0 %v64
    %231 = vmatprep.subr.bf16.mxu0 0
    %232 = vmatpush2.bf16.msra.mxu0 0
    %233 = vmatprep.subr.bf16.mxu0 0
    %234 = vmatpush2.bf16.msra.mxu0 0
    %235 = vmatprep.subr.bf16.mxu0 0
    %236 = vmatpush2.bf16.msra.mxu0 0
    %237 = vmatprep.subr.bf16.mxu0 0
    %238 = vmatpush2.bf16.msra.mxu0 0
    %239 = vmatprep.subr.bf16.mxu0 0
    %240 = vmatpush2.bf16.msra.mxu0 0
    %241 = vmatprep.subr.bf16.mxu0 0
    %242 = vmatpush2.bf16.msra.mxu0 0
    %243 = vmatprep.subr.bf16.mxu0 0
    %244 = vmatpush2.bf16.msra.mxu0 0
    %245 = vmatprep.subr.bf16.mxu0 0
    %246 = vmatpush2.bf16.msra.mxu0 0
    %247 = vmatprep.mubr.bf16.mxu0 0
    %248 = vmatmul.mubr.bf16.gmra.mxu0 %v213
    %v249 = vpop.f32.mrf.mxu0
    %v250 = vadd.f32 %v23, %v249
    %v251 = vpop.f32.mrf.mxu0
    %v252 = vpop.f32.mrf.mxu0
    %v253 = vpop.f32.mrf.mxu0
    %254 = vdwg.mxu0
    %v256 = vcombine.high %v250, %v250
    %v258 = vunpack.c.l.s4 1966171168
    %v259 = vunpack.c.0.s8 %v258
    %v260 = vlaneseq
    %v261 = vshrl.u32 %v260, 7
    %v262 = vsub.s32 %v259, %v261
    %v263 = vrot.slane %v250, %v262
    %v265 = vunpack.c.l.s4 1966171168
    %v266 = vunpack.c.0.s8 %v265
    %v267 = vlaneseq
    %v268 = vshrl.u32 %v267, 7
    %v269 = vsub.s32 %v266, %v268
    %v270 = vrot.slane %v256, %v269
    %v271 = vcombine.high %v263, %v263
    %v272 = vcombine.high %v270, %v270
    %v274 = vunpack.c.l.s4 1966171168
    %v275 = vunpack.c.0.s8 %v274
    %v276 = vlaneseq
    %v277 = vshrl.u32 %v276, 7
    %v278 = vsub.s32 %v275, %v277
    %v279 = vrot.slane %v263, %v278
    %v281 = vunpack.c.l.s4 1966171168
    %v282 = vunpack.c.0.s8 %v281
    %v283 = vlaneseq
    %v284 = vshrl.u32 %v283, 7
    %v285 = vsub.s32 %v282, %v284
    %v286 = vrot.slane %v270, %v285
    %v288 = vunpack.c.l.s4 1966171168
    %v289 = vunpack.c.0.s8 %v288
    %v290 = vlaneseq
    %v291 = vshrl.u32 %v290, 7
    %v292 = vsub.s32 %v289, %v291
    %v293 = vrot.slane %v271, %v292
    %v295 = vunpack.c.l.s4 1966171168
    %v296 = vunpack.c.0.s8 %v295
    %v297 = vlaneseq
    %v298 = vshrl.u32 %v297, 7
    %v299 = vsub.s32 %v296, %v298
    %v300 = vrot.slane %v272, %v299
    %v301 = vcombine.high %v279, %v279
    %v302 = vcombine.high %v286, %v286
    %v303 = vcombine.high %v293, %v293
    %v304 = vcombine.high %v300, %v300
    %313 = vst [vmem:[#allocation2 + $0x1] sm:$0x1] %v279
    %314 = vst [vmem:[#allocation2 + $0x3] sm:$0x1] %v293
    %315 = vst [vmem:[#allocation2 + $0x5] sm:$0x1] %v301
    %316 = vst [vmem:[#allocation2 + $0x7] sm:$0x1] %v303
    %317 = vst [vmem:[#allocation2 + $0x9] sm:$0x1] %v286
    %318 = vst [vmem:[#allocation2 + $0xb] sm:$0x1] %v300
    %319 = vst [vmem:[#allocation2 + $0xd] sm:$0x1] %v302
    %320 = vst [vmem:[#allocation2 + $0xf] sm:$0x1] %v304
    // Predicated region
    $region14: #{tpu_custom_call.1} parent=1 // pred_check
      _
    $region15: #{tpu_custom_call.1} parent=1 // pred_check_branch
      %322 = sbr.rel (0) target = $region17
    $region16: #{tpu_custom_call.1} parent=1 // pred_region
      %s324 = ssub.s32 256, 256
      %325 = vsyncadd [#allocation3], %s324
      %s326 = sshll.u32 [#allocation2], 4
      %s327 = int_to_ptr.vmem [resolvable:$true] %s326
      %332 = dma.vmem_to_hbm [thread:$0]  %s327, 256, %s3, [#allocation3], 32, 32, 2
    $region17: #{tpu_custom_call.1} parent=1 // pred_fallthru
      _
    // Predicated region
    $region18: #{tpu_custom_call.1} parent=1 // pred_check
      _
    $region19: #{tpu_custom_call.1} parent=1 // pred_check_branch
      %334 = sbr.rel (0) target = $region21
    $region20: #{tpu_custom_call.1} parent=1 // pred_region
      %335 = dma.done [#allocation3], 256
    $region21: #{tpu_custom_call.1} parent=1 // pred_fallthru
      _
    %336 = vsyncpa [#allocation3], 1

// kernel: tpu_custom_call.1
$region0: #{tpu_custom_call.1}
  #allocation0 [shape = 'u32[]', space=smem, size = 0x4, offset = 0x4, fixed_abs, tag = 'smem constant byte address 0x4 - core index']
  #allocation1 [shape = 'u32[144,128]{1,0:T(1,128)}', space=vmem, size = 0x12000, scoped, tag = 'internal scratch']
  %s0 = inlined_call_operand.hbm [shape: f32[16,16], index: 0, kind: input, shape index: {}]
  %s1 = inlined_call_operand.hbm [shape: bf16[16,128], index: 1, kind: input, shape index: {}]
  %s2 = inlined_call_operand.vmem [shape: f32[1,128], index: 2, kind: input, shape index: {}]
  %s3 = inlined_call_operand.hbm [shape: f32[16,128], index: 3, kind: output, shape index: {}]
  %s4 = sld [smem:[#allocation0]]
  $region30: #{tpu_custom_call.1} parent=0
    _
  %s6 = ssub.s32 1, %s4
  %s7 = scalar_select 0, %s6, %s4
  $region1: #{tpu_custom_call.1} parent=0
    #allocation2 [shape = 'u8[8192]{0}', space=vmem, size = 0x2000, scoped, tag = 'input window, operand 0, single buffered']
    #allocation3 [shape = 's32[1]{0}', space=sflag, size = 0x4, scoped, tag = 'scoped memory for tpu_custom_call.1']
    #allocation4 [shape = 's32[1]{0}', space=sflag, size = 0x4, scoped, tag = 'scoped memory for tpu_custom_call.1']
    #allocation5 [shape = 'u8[4096]{0}', space=vmem, size = 0x1000, scoped, tag = 'input window, operand 1, single buffered']
    #allocation6 [shape = 's32[1]{0}', space=sflag, size = 0x4, scoped, tag = 'scoped memory for tpu_custom_call.1']
    #allocation7 [shape = 'u8[8192]{0}', space=vmem, size = 0x2000, scoped, tag = 'output window, operand 0, single buffered']
    %8 = vsyncpa [#allocation3], 0
    %9 = vsyncpa [#allocation6], 0
    %10 = vsyncpa [#allocation4], 0
    // Predicated region
    $region2: #{tpu_custom_call.1} parent=1 // pred_check
      _
    $region3: #{tpu_custom_call.1} parent=1 // pred_check_branch
      %12 = sbr.rel (0) target = $region5
    $region4: #{tpu_custom_call.1} parent=1 // pred_region
      %s14 = ssub.s32 256, 256
      %15 = vsyncadd [#allocation3], %s14
      %s16 = sshll.u32 [#allocation2], 4
      %s17 = int_to_ptr.vmem [resolvable:$true] %s16
      %22 = dma.hbm_to_vmem [thread:$0]  %s0, 256, %s17, [#allocation3], 128, 128, 8
    $region5: #{tpu_custom_call.1} parent=1 // pred_fallthru
      _
    // Predicated region
    $region6: #{tpu_custom_call.1} parent=1 // pred_check
      _
    $region7: #{tpu_custom_call.1} parent=1 // pred_check_branch
      %24 = sbr.rel (0) target = $region9
    $region8: #{tpu_custom_call.1} parent=1 // pred_region
      %s26 = ssub.s32 128, 128
      %27 = vsyncadd [#allocation6], %s26
      %s28 = sshll.u32 [#allocation5], 4
      %s29 = int_to_ptr.vmem [resolvable:$true] %s28
      %34 = dma.hbm_to_vmem [thread:$0]  %s1, 128, %s29, [#allocation6], 64, 64, 4
    $region9: #{tpu_custom_call.1} parent=1 // pred_fallthru
      _
    // Predicated region
    $region10: #{tpu_custom_call.1} parent=1 // pred_check
      _
    $region11: #{tpu_custom_call.1} parent=1 // pred_check_branch
      %36 = sbr.rel (0) target = $region13
    $region12: #{tpu_custom_call.1} parent=1 // pred_region
      _
    $region13: #{tpu_custom_call.1} parent=1 // pred_fallthru
      _
    // Predicated region
    $region14: #{tpu_custom_call.1} parent=1 // pred_check
      _
    $region15: #{tpu_custom_call.1} parent=1 // pred_check_branch
      %38 = sbr.rel (0) target = $region17
    $region16: #{tpu_custom_call.1} parent=1 // pred_region
      %39 = dma.done [#allocation3], 256
    $region17: #{tpu_custom_call.1} parent=1 // pred_fallthru
      _
    // Predicated region
    $region18: #{tpu_custom_call.1} parent=1 // pred_check
      _
    $region19: #{tpu_custom_call.1} parent=1 // pred_check_branch
      %41 = sbr.rel (0) target = $region21
    $region20: #{tpu_custom_call.1} parent=1 // pred_region
      %42 = dma.done [#allocation6], 128
    $region21: #{tpu_custom_call.1} parent=1 // pred_fallthru
      _
    %v44 = vld [vmem:[#allocation2] sm:$0xff]
    %v45 = vld [vmem:[#allocation2 + $0x8] sm:$0xff]
    %v46 = vpack.c.bf16 %v45, %v44
    %v47 = vld [vmem:[#allocation5] sm:$0xf]
    %v48 = vld [vmem:[#allocation5 + $0x4] sm:$0xf]
    %v49 = vld [vmem:[%s2] sm:$0x1]
    %v51 = vlaneseq
    %v52 = vshrl.u32 %v51, 7
    %v53 = vsub.s32 0, %v52
    %v54 = vrot.slane %v49, %v53
    %v58 = vunpack.c.l.b16 %v47
    %v59 = vunpack.c.l.b16 %v48
    %v60 = vpack.c.b16 %v59, %v58
    %vm62 = vcmask 130048
    %v64 = vsel %vm62, %v46, 0
    %66 = vmatprep.subr.bf16.mxu0 0
    %67 = vmatpush1.bf16.msra.mxu0 0
    %68 = vmatprep.subr.bf16.mxu0 0
    %69 = vmatpush1.bf16.msra.mxu0 0
    %70 = vmatprep.subr.bf16.mxu0 0
    %71 = vmatpush1.bf16.msra.mxu0 0
    %72 = vmatprep.subr.bf16.mxu0 0
    %73 = vmatpush1.bf16.msra.mxu0 0
    %74 = vmatprep.subr.bf16.mxu0 0
    %75 = vmatpush1.bf16.msra.mxu0 0
    %76 = vmatprep.subr.bf16.mxu0 0
    %77 = vmatpush1.bf16.msra.mxu0 0
    %78 = vmatprep.subr.bf16.mxu0 0
    %79 = vmatpush1.bf16.msra.mxu0 0
    %80 = vmatprep.subr.bf16.mxu0 0
    %81 = vmatpush1.bf16.msra.mxu0 %v60
    %82 = vmatprep.subr.bf16.mxu0 0
    %83 = vmatpush2.bf16.msra.mxu0 0
    %84 = vmatprep.subr.bf16.mxu0 0
    %85 = vmatpush2.bf16.msra.mxu0 0
    %86 = vmatprep.subr.bf16.mxu0 0
    %87 = vmatpush2.bf16.msra.mxu0 0
    %88 = vmatprep.subr.bf16.mxu0 0
    %89 = vmatpush2.bf16.msra.mxu0 0
    %90 = vmatprep.subr.bf16.mxu0 0
    %91 = vmatpush2.bf16.msra.mxu0 0
    %92 = vmatprep.subr.bf16.mxu0 0
    %93 = vmatpush2.bf16.msra.mxu0 0
    %94 = vmatprep.subr.bf16.mxu0 0
    %95 = vmatpush2.bf16.msra.mxu0 0
    %96 = vmatprep.subr.bf16.mxu0 0
    %97 = vmatpush2.bf16.msra.mxu0 0
    %98 = vmatprep.mubr.bf16.mxu0 0
    %99 = vmatmul.mubr.bf16.gmra.mxu0 %v64
    %v100 = vpop.f32.mrf.mxu0
    %v101 = vadd.f32 %v54, %v100
    %v102 = vpop.f32.mrf.mxu0
    %v103 = vpop.f32.mrf.mxu0
    %v104 = vadd.f32 %v54, %v103
    %v105 = vpop.f32.mrf.mxu0
    %106 = vdwg.mxu0
    %107 = vst [vmem:[#allocation7] sm:$0xff] %v101
    %108 = vst [vmem:[#allocation7 + $0x8] sm:$0xff] %v104
    // Predicated region
    $region22: #{tpu_custom_call.1} parent=1 // pred_check
      _
    $region23: #{tpu_custom_call.1} parent=1 // pred_check_branch
      %110 = sbr.rel (0) target = $region25
    $region24: #{tpu_custom_call.1} parent=1 // pred_region
      %s112 = ssub.s32 256, 256
      %113 = vsyncadd [#allocation4], %s112
      %s114 = sshll.u32 [#allocation7], 4
      %s115 = int_to_ptr.vmem [resolvable:$true] %s114
      %120 = dma.vmem_to_hbm [thread:$0]  %s115, 256, %s3, [#allocation4], 128, 128, 8
    $region25: #{tpu_custom_call.1} parent=1 // pred_fallthru
      _
    // Predicated region
    $region26: #{tpu_custom_call.1} parent=1 // pred_check
      _
    $region27: #{tpu_custom_call.1} parent=1 // pred_check_branch
      %122 = sbr.rel (0) target = $region29
    $region28: #{tpu_custom_call.1} parent=1 // pred_region
      %123 = dma.done [#allocation4], 256
    $region29: #{tpu_custom_call.1} parent=1 // pred_fallthru
      _
    %124 = vsyncpa [#allocation3], 1
    %125 = vsyncpa [#allocation6], 1
    %126 = vsyncpa [#allocation4], 1

</llo_original>
